<compile_context>
chip_gen: v7x
topology: tpu7x:2x2x1
jax: 0.10.0
libtpu: 0.0.40
codegen_flags: <defaults>
</compile_context>

<pallas_src>
import jax
import jax.numpy as jnp
from jax.experimental import pallas as pl
from jax.experimental.pallas import tpu as pltpu

HID_SIZE = 128
OUT_PAD = 128   # final head padded 1 -> 128 lanes for a lane-dense store


# ----------------------------------------------------------------------------
# Pallas kernel: fused 3-layer MLP (Linear+ReLU, Linear+ReLU, Linear)
# ----------------------------------------------------------------------------
def _critic_mlp_kernel(x_ref, w1_ref, b1_ref, w2_ref, b2_ref,
                       w3_ref, b3_ref, o_ref):
    # x: (TM, K); w1: (K, H); w2: (H, H); w3: (H, OUT_PAD); biases (1, .)
    h = jnp.dot(x_ref[...], w1_ref[...], preferred_element_type=jnp.float32)
    h = jnp.maximum(h + b1_ref[...], 0.0)
    h = jnp.dot(h, w2_ref[...], preferred_element_type=jnp.float32)
    h = jnp.maximum(h + b2_ref[...], 0.0)
    y = jnp.dot(h, w3_ref[...], preferred_element_type=jnp.float32)
    o_ref[...] = (y + b3_ref[...]).astype(o_ref.dtype)


def _round_up(a, b):
    return ((a + b - 1) // b) * b


def model_critic_linear_forward(params, x, *, max_tile_m=512):
    """value = MLP(x); x is (batch, obs_size) float32, returns (batch, 1)."""
    M, K = x.shape
    assert K == params["w1"].shape[0], (K, params["w1"].shape)

    # M-tiling: small batches -> single block; large batches -> tiled
    # "parallel" grid (double-buffered x/out DMA, both TCs on v7x).
    m_pad = _round_up(max(M, 8), 8)
    tile_m = m_pad if m_pad <= max_tile_m else max_tile_m
    m_pad = _round_up(m_pad, tile_m)
    grid_m = m_pad // tile_m

    xf = x.astype(jnp.float32)
    if m_pad != M:
        xf = jnp.pad(xf, ((0, m_pad - M), (0, 0)))

    # Approx VMEM need: double-buffered x/out tiles + resident weights/biases.
    vmem_bytes = 4 * (2 * tile_m * (K + OUT_PAD)
                      + K * HID_SIZE + HID_SIZE * HID_SIZE
                      + HID_SIZE * OUT_PAD + 3 * HID_SIZE) + (2 << 20)

    out = pl.pallas_call(
        _critic_mlp_kernel,
        out_shape=jax.ShapeDtypeStruct((m_pad, OUT_PAD), jnp.float32),
        grid_spec=pltpu.PrefetchScalarGridSpec(
            num_scalar_prefetch=0,
            grid=(grid_m,),
            in_specs=[
                pl.BlockSpec((tile_m, K), lambda i: (i, 0)),          # x tile
                pl.BlockSpec((K, HID_SIZE), lambda i: (0, 0)),        # w1
                pl.BlockSpec((1, HID_SIZE), lambda i: (0, 0)),        # b1
                pl.BlockSpec((HID_SIZE, HID_SIZE), lambda i: (0, 0)),  # w2
                pl.BlockSpec((1, HID_SIZE), lambda i: (0, 0)),        # b2
                pl.BlockSpec((HID_SIZE, OUT_PAD), lambda i: (0, 0)),  # w3 pad
                pl.BlockSpec((1, OUT_PAD), lambda i: (0, 0)),         # b3 pad
            ],
            out_specs=pl.BlockSpec((tile_m, OUT_PAD), lambda i: (i, 0)),
        ),
        compiler_params=pltpu.CompilerParams(
            dimension_semantics=("parallel",),
            vmem_limit_bytes=int(min(vmem_bytes, 64 << 20)),
        ),
    )(xf, params["w1"], params["b1"], params["w2"], params["b2"],
      params["w3p"], params["b3p"])

    return out[:M, :1]   # drop row padding, keep the single real output lane


# ----------------------------------------------------------------------------
# Parameters (deterministic init, torch nn.Linear-style uniform(+-1/sqrt(fan)))
# ----------------------------------------------------------------------------
def init_params(obs_size, key):
    keys = jax.random.split(key, 6)

    def uniform(k, shape, fan_in):
        bound = 1.0 / jnp.sqrt(jnp.float32(fan_in))
        return jax.random.uniform(k, shape, jnp.float32, -bound, bound)

    w1 = uniform(keys[0], (obs_size, HID_SIZE), obs_size)
    b1 = uniform(keys[1], (1, HID_SIZE), obs_size)
    w2 = uniform(keys[2], (HID_SIZE, HID_SIZE), HID_SIZE)
    b2 = uniform(keys[3], (1, HID_SIZE), HID_SIZE)
    w3 = uniform(keys[4], (HID_SIZE, 1), HID_SIZE)
    b3 = uniform(keys[5], (1, 1), HID_SIZE)

    # Zero-pad the final head to OUT_PAD lanes once at init time so the
    # kernel's output store is lane-dense; column 0 holds the real value.
    w3p = jnp.zeros((HID_SIZE, OUT_PAD), jnp.float32).at[:, :1].set(w3)
    b3p = jnp.zeros((1, OUT_PAD), jnp.float32).at[:, :1].set(b3)

    return {"w1": w1, "b1": b1, "w2": w2, "b2": b2,
            "w3p": w3p, "b3p": b3p, "w3": w3, "b3": b3}


# ----------------------------------------------------------------------------
# Demo / self-check
# ----------------------------------------------------------------------------
if __name__ == "__main__":
    key = jax.random.PRNGKey(0)
    k_param, k_x = jax.random.split(key)

    obs_size = 32
    batch = 2

    params = init_params(obs_size, k_param)
    x = jax.random.normal(k_x, (batch, obs_size), jnp.float32)

    fwd = jax.jit(model_critic_linear_forward)
    value = fwd(params, x)
    jax.block_until_ready(value)
    assert value.shape == (batch, 1), value.shape

    # Pure-JAX reference of the same math (unpadded head) for a sanity check.
    h = jnp.maximum(x @ params["w1"] + params["b1"], 0.0)
    h = jnp.maximum(h @ params["w2"] + params["b2"], 0.0)
    ref = h @ params["w3"] + params["b3"]
    assert jnp.allclose(value, ref, atol=1e-2, rtol=1e-2), (value, ref)

    print("KERNEL_OK")
</pallas_src>

<mosaic_0001>
module attributes {stable_mosaic.version = 11 : i64} {
  func.func @_critic_mlp_kernel(%arg0: i32, %arg1: memref<8x32xf32, #tpu.memory_space<vmem>>, %arg2: memref<32x128xf32, #tpu.memory_space<vmem>>, %arg3: memref<1x128xf32, #tpu.memory_space<vmem>>, %arg4: memref<128x128xf32, #tpu.memory_space<vmem>>, %arg5: memref<1x128xf32, #tpu.memory_space<vmem>>, %arg6: memref<128x128xf32, #tpu.memory_space<vmem>>, %arg7: memref<1x128xf32, #tpu.memory_space<vmem>>, %arg8: memref<8x128xf32, #tpu.memory_space<vmem>>) attributes {dimension_semantics = [#tpu.dimension_semantics<parallel>], iteration_bounds = array<i64: 1>, scalar_prefetch = 0 : i64, scratch_operands = 0 : i64, tpu.core_type = #tpu.core_type<tc>, window_params = [{transform_indices = @transform_0, window_bounds = array<i64: 8, 32>}, {pipeline_mode = #tpu.pipeline_mode<synchronous>, transform_indices = @transform_1, window_bounds = array<i64: 32, 128>}, {pipeline_mode = #tpu.pipeline_mode<synchronous>, transform_indices = @transform_2, window_bounds = array<i64: 1, 128>}, {pipeline_mode = #tpu.pipeline_mode<synchronous>, transform_indices = @transform_3, window_bounds = array<i64: 128, 128>}, {pipeline_mode = #tpu.pipeline_mode<synchronous>, transform_indices = @transform_4, window_bounds = array<i64: 1, 128>}, {pipeline_mode = #tpu.pipeline_mode<synchronous>, transform_indices = @transform_5, window_bounds = array<i64: 128, 128>}, {pipeline_mode = #tpu.pipeline_mode<synchronous>, transform_indices = @transform_6, window_bounds = array<i64: 1, 128>}, {transform_indices = @transform_7, window_bounds = array<i64: 8, 128>}]} {
    %c0 = arith.constant 0 : index
    %c0_0 = arith.constant 0 : index
    %0 = vector.load %arg1[%c0, %c0_0] : memref<8x32xf32, #tpu.memory_space<vmem>>, vector<8x32xf32>
    %c0_1 = arith.constant 0 : index
    %c0_2 = arith.constant 0 : index
    %1 = vector.load %arg2[%c0_1, %c0_2] : memref<32x128xf32, #tpu.memory_space<vmem>>, vector<32x128xf32>
    %cst = arith.constant dense<0.000000e+00> : vector<8x128xf32>
    %2 = tpu.matmul %0, %1, %cst {dimension_numbers = #tpu.dot_dimension_numbers<[1], [0], [0], [1], [0, 0, 1, 1], [], []>} : vector<8x32xf32>, vector<32x128xf32>, vector<8x128xf32> -> vector<8x128xf32>
    %c0_3 = arith.constant 0 : index
    %c0_4 = arith.constant 0 : index
    %3 = vector.load %arg3[%c0_3, %c0_4] : memref<1x128xf32, #tpu.memory_space<vmem>>, vector<1x128xf32>
    %4 = vector.broadcast %3 : vector<1x128xf32> to vector<8x128xf32>
    %5 = arith.addf %2, %4 : vector<8x128xf32>
    %cst_5 = arith.constant 0.000000e+00 : f32
    %6 = vector.broadcast %cst_5 : f32 to vector<8x128xf32>
    %7 = arith.maximumf %5, %6 : vector<8x128xf32>
    %c0_6 = arith.constant 0 : index
    %c0_7 = arith.constant 0 : index
    %8 = vector.load %arg4[%c0_6, %c0_7] : memref<128x128xf32, #tpu.memory_space<vmem>>, vector<128x128xf32>
    %cst_8 = arith.constant dense<0.000000e+00> : vector<8x128xf32>
    %9 = tpu.matmul %7, %8, %cst_8 {dimension_numbers = #tpu.dot_dimension_numbers<[1], [0], [0], [1], [0, 0, 1, 1], [], []>} : vector<8x128xf32>, vector<128x128xf32>, vector<8x128xf32> -> vector<8x128xf32>
    %c0_9 = arith.constant 0 : index
    %c0_10 = arith.constant 0 : index
    %10 = vector.load %arg5[%c0_9, %c0_10] : memref<1x128xf32, #tpu.memory_space<vmem>>, vector<1x128xf32>
    %11 = vector.broadcast %10 : vector<1x128xf32> to vector<8x128xf32>
    %12 = arith.addf %9, %11 : vector<8x128xf32>
    %cst_11 = arith.constant 0.000000e+00 : f32
    %13 = vector.broadcast %cst_11 : f32 to vector<8x128xf32>
    %14 = arith.maximumf %12, %13 : vector<8x128xf32>
    %c0_12 = arith.constant 0 : index
    %c0_13 = arith.constant 0 : index
    %15 = vector.load %arg6[%c0_12, %c0_13] : memref<128x128xf32, #tpu.memory_space<vmem>>, vector<128x128xf32>
    %cst_14 = arith.constant dense<0.000000e+00> : vector<8x128xf32>
    %16 = tpu.matmul %14, %15, %cst_14 {dimension_numbers = #tpu.dot_dimension_numbers<[1], [0], [0], [1], [0, 0, 1, 1], [], []>} : vector<8x128xf32>, vector<128x128xf32>, vector<8x128xf32> -> vector<8x128xf32>
    %c0_15 = arith.constant 0 : index
    %c0_16 = arith.constant 0 : index
    %17 = vector.load %arg7[%c0_15, %c0_16] : memref<1x128xf32, #tpu.memory_space<vmem>>, vector<1x128xf32>
    %18 = vector.broadcast %17 : vector<1x128xf32> to vector<8x128xf32>
    %19 = arith.addf %16, %18 : vector<8x128xf32>
    %c0_17 = arith.constant 0 : index
    %c0_18 = arith.constant 0 : index
    %20 = vector.load %arg8[%c0_17, %c0_18] : memref<8x128xf32, #tpu.memory_space<vmem>>, vector<8x128xf32>
    tpu.vector_store %arg8[%c0_17, %c0_18], %19 {strides = array<i32>} : memref<8x128xf32, #tpu.memory_space<vmem>>, vector<8x128xf32>,
    return
  }
  func.func @transform_0(%arg0: i32) -> (i32, i32) {
    %c0_i32 = arith.constant 0 : i32
    %c0_i32_0 = arith.constant 0 : i32
    return %arg0, %c0_i32 : i32, i32
  }
  func.func @transform_1(%arg0: i32) -> (i32, i32) {
    %c0_i32 = arith.constant 0 : i32
    %c0_i32_0 = arith.constant 0 : i32
    %c0_i32_1 = arith.constant 0 : i32
    return %c0_i32, %c0_i32_0 : i32, i32
  }
  func.func @transform_2(%arg0: i32) -> (i32, i32) {
    %c0_i32 = arith.constant 0 : i32
    %c0_i32_0 = arith.constant 0 : i32
    %c0_i32_1 = arith.constant 0 : i32
    return %c0_i32, %c0_i32_0 : i32, i32
  }
  func.func @transform_3(%arg0: i32) -> (i32, i32) {
    %c0_i32 = arith.constant 0 : i32
    %c0_i32_0 = arith.constant 0 : i32
    %c0_i32_1 = arith.constant 0 : i32
    return %c0_i32, %c0_i32_0 : i32, i32
  }
  func.func @transform_4(%arg0: i32) -> (i32, i32) {
    %c0_i32 = arith.constant 0 : i32
    %c0_i32_0 = arith.constant 0 : i32
    %c0_i32_1 = arith.constant 0 : i32
    return %c0_i32, %c0_i32_0 : i32, i32
  }
  func.func @transform_5(%arg0: i32) -> (i32, i32) {
    %c0_i32 = arith.constant 0 : i32
    %c0_i32_0 = arith.constant 0 : i32
    %c0_i32_1 = arith.constant 0 : i32
    return %c0_i32, %c0_i32_0 : i32, i32
  }
  func.func @transform_6(%arg0: i32) -> (i32, i32) {
    %c0_i32 = arith.constant 0 : i32
    %c0_i32_0 = arith.constant 0 : i32
    %c0_i32_1 = arith.constant 0 : i32
    return %c0_i32, %c0_i32_0 : i32, i32
  }
  func.func @transform_7(%arg0: i32) -> (i32, i32) {
    %c0_i32 = arith.constant 0 : i32
    %c0_i32_0 = arith.constant 0 : i32
    return %arg0, %c0_i32 : i32, i32
  }
}

</mosaic_0001>

<llo_original>
// kernel: model_critic_linear_forward.1
$region0: #{model_critic_linear_forward.1}
  #allocation0 [shape = 'u32[]', space=smem, size = 0x4, offset = 0x4, fixed_abs, tag = 'smem constant byte address 0x4 - core index']
  #allocation1 [shape = 'u32[144,128]{1,0:T(1,128)}', space=vmem, size = 0x12000, scoped, tag = 'internal scratch']
  %s0 = inlined_call_operand.vmem [shape: f32[8,32], index: 0, kind: input, shape index: {}]
  %s1 = inlined_call_operand.hbm [shape: f32[32,128], index: 1, kind: input, shape index: {}]
  %s2 = inlined_call_operand.vmem [shape: f32[1,128], index: 2, kind: input, shape index: {}]
  %s3 = inlined_call_operand.hbm [shape: f32[128,128], index: 3, kind: input, shape index: {}]
  %s4 = inlined_call_operand.vmem [shape: f32[1,128], index: 4, kind: input, shape index: {}]
  %s5 = inlined_call_operand.hbm [shape: f32[128,128], index: 5, kind: input, shape index: {}]
  %s6 = inlined_call_operand.vmem [shape: f32[1,128], index: 6, kind: input, shape index: {}]
  %s7 = inlined_call_operand.vmem [shape: f32[8,128], index: 7, kind: output, shape index: {}]
  %s8 = sld [smem:[#allocation0]]
  $region50: #{model_critic_linear_forward.1} parent=0
    _
  %s10 = ssub.s32 1, %s8
  %s11 = scalar_select 0, %s10, %s8
  $region1: #{model_critic_linear_forward.1} parent=0
    #allocation2 [shape = 'u8[16384]{0}', space=vmem, size = 0x4000, scoped, tag = 'input window, operand 1, single buffered']
    #allocation3 [shape = 's32[1]{0}', space=sflag, size = 0x4, scoped, tag = 'scoped memory for model_critic_linear_forward.1']
    #allocation4 [shape = 'u8[65536]{0}', space=vmem, size = 0x10000, scoped, tag = 'input window, operand 3, single buffered']
    #allocation5 [shape = 's32[1]{0}', space=sflag, size = 0x4, scoped, tag = 'scoped memory for model_critic_linear_forward.1']
    #allocation6 [shape = 'u8[65536]{0}', space=vmem, size = 0x10000, scoped, tag = 'input window, operand 5, single buffered']
    %12 = vsyncpa [#allocation3], 0
    %13 = vsyncpa [#allocation5], 0
    // Predicated region
    $region2: #{model_critic_linear_forward.1} parent=1 // pred_check
      _
    $region3: #{model_critic_linear_forward.1} parent=1 // pred_check_branch
      %15 = sbr.rel (0) target = $region5
    $region4: #{model_critic_linear_forward.1} parent=1 // pred_region
      _
    $region5: #{model_critic_linear_forward.1} parent=1 // pred_fallthru
      _
    // Predicated region
    $region6: #{model_critic_linear_forward.1} parent=1 // pred_check
      _
    $region7: #{model_critic_linear_forward.1} parent=1 // pred_check_branch
      %17 = sbr.rel (0) target = $region9
    $region8: #{model_critic_linear_forward.1} parent=1 // pred_region
      %s19 = ssub.s32 512, 512
      %20 = vsyncadd [#allocation3], %s19
      %s21 = sshll.u32 [#allocation2], 4
      %s22 = int_to_ptr.vmem [resolvable:$true] %s21
      %27 = dma.hbm_to_vmem [thread:$0]  %s1, 512, %s22, [#allocation3], 128, 128, 8
    $region9: #{model_critic_linear_forward.1} parent=1 // pred_fallthru
      _
    // Predicated region
    $region10: #{model_critic_linear_forward.1} parent=1 // pred_check
      _
    $region11: #{model_critic_linear_forward.1} parent=1 // pred_check_branch
      %29 = sbr.rel (0) target = $region13
    $region12: #{model_critic_linear_forward.1} parent=1 // pred_region
      _
    $region13: #{model_critic_linear_forward.1} parent=1 // pred_fallthru
      _
    // Predicated region
    $region14: #{model_critic_linear_forward.1} parent=1 // pred_check
      _
    $region15: #{model_critic_linear_forward.1} parent=1 // pred_check_branch
      %31 = sbr.rel (0) target = $region17
    $region16: #{model_critic_linear_forward.1} parent=1 // pred_region
      %s33 = ssub.s32 2048, 2048
      %34 = vsyncadd [#allocation5], %s33
      %s35 = sshll.u32 [#allocation4], 4
      %s36 = int_to_ptr.vmem [resolvable:$true] %s35
      %41 = dma.hbm_to_vmem [thread:$0]  %s3, 2048, %s36, [#allocation5], 128, 128, 8
    $region17: #{model_critic_linear_forward.1} parent=1 // pred_fallthru
      _
    // Predicated region
    $region18: #{model_critic_linear_forward.1} parent=1 // pred_check
      _
    $region19: #{model_critic_linear_forward.1} parent=1 // pred_check_branch
      %43 = sbr.rel (0) target = $region21
    $region20: #{model_critic_linear_forward.1} parent=1 // pred_region
      _
    $region21: #{model_critic_linear_forward.1} parent=1 // pred_fallthru
      _
    // Predicated region
    $region22: #{model_critic_linear_forward.1} parent=1 // pred_check
      _
    $region23: #{model_critic_linear_forward.1} parent=1 // pred_check_branch
      %45 = sbr.rel (0) target = $region25
    $region24: #{model_critic_linear_forward.1} parent=1 // pred_region
      %s47 = ssub.s32 2048, 2048
      %48 = vsyncadd [#allocation5], %s47
      %s49 = sshll.u32 [#allocation6], 4
      %s50 = int_to_ptr.vmem [resolvable:$true] %s49
      %55 = dma.hbm_to_vmem [thread:$0]  %s5, 2048, %s50, [#allocation5], 128, 128, 8
    $region25: #{model_critic_linear_forward.1} parent=1 // pred_fallthru
      _
    // Predicated region
    $region26: #{model_critic_linear_forward.1} parent=1 // pred_check
      _
    $region27: #{model_critic_linear_forward.1} parent=1 // pred_check_branch
      %57 = sbr.rel (0) target = $region29
    $region28: #{model_critic_linear_forward.1} parent=1 // pred_region
      _
    $region29: #{model_critic_linear_forward.1} parent=1 // pred_fallthru
      _
    // Predicated region
    $region30: #{model_critic_linear_forward.1} parent=1 // pred_check
      _
    $region31: #{model_critic_linear_forward.1} parent=1 // pred_check_branch
      %59 = sbr.rel (0) target = $region33
    $region32: #{model_critic_linear_forward.1} parent=1 // pred_region
      %60 = dma.done [#allocation3], 512
    $region33: #{model_critic_linear_forward.1} parent=1 // pred_fallthru
      _
    // Predicated region
    $region34: #{model_critic_linear_forward.1} parent=1 // pred_check
      _
    $region35: #{model_critic_linear_forward.1} parent=1 // pred_check_branch
      %62 = sbr.rel (0) target = $region37
    $region36: #{model_critic_linear_forward.1} parent=1 // pred_region
      %63 = dma.done [#allocation5], 2048
    $region37: #{model_critic_linear_forward.1} parent=1 // pred_fallthru
      _
    // Predicated region
    $region38: #{model_critic_linear_forward.1} parent=1 // pred_check
      _
    $region39: #{model_critic_linear_forward.1} parent=1 // pred_check_branch
      %65 = sbr.rel (0) target = $region41
    $region40: #{model_critic_linear_forward.1} parent=1 // pred_region
      %66 = dma.done [#allocation5], 2048
    $region41: #{model_critic_linear_forward.1} parent=1 // pred_fallthru
      _
    %v67 = vld [vmem:[%s0] sm:$0xff]
    %v68 = vld [vmem:[#allocation2] sm:$0xff]
    %v69 = vld [vmem:[#allocation2 + $0x8] sm:$0xff]
    %v70 = vld [vmem:[#allocation2 + $0x10] sm:$0xff]
    %v71 = vld [vmem:[#allocation2 + $0x18] sm:$0xff]
    %v72 = vld [vmem:[%s2] sm:$0x1]
    %v74 = vlaneseq
    %v75 = vshrl.u32 %v74, 7
    %v76 = vsub.s32 0, %v75
    %v77 = vrot.slane %v72, %v76
    %vm79 = vcmask 261120
    %v81 = vsel %vm79, %v67, 0
    %83 = vmatprep.subr.mxu0 0.0
    %84 = vmatpush1.msra.mxu0 %v68
    %85 = vmatprep.subr.mxu0 0.0
    %86 = vmatpush1.msra.mxu0 %v69
    %87 = vmatprep.subr.mxu0 0.0
    %88 = vmatpush1.msra.mxu0 %v70
    %89 = vmatprep.subr.mxu0 0.0
    %90 = vmatpush1.msra.mxu0 %v71
    %91 = vmatprep.subr.mxu0 0.0
    %92 = vmatpush1.msra.mxu0 0.0
    %93 = vmatprep.subr.mxu0 0.0
    %94 = vmatpush1.msra.mxu0 0.0
    %95 = vmatprep.subr.mxu0 0.0
    %96 = vmatpush1.msra.mxu0 0.0
    %97 = vmatprep.subr.mxu0 0.0
    %98 = vmatpush1.msra.mxu0 0.0
    %99 = vmatprep.subr.mxu0 0.0
    %100 = vmatpush1.msra.mxu0 0.0
    %101 = vmatprep.subr.mxu0 0.0
    %102 = vmatpush1.msra.mxu0 0.0
    %103 = vmatprep.subr.mxu0 0.0
    %104 = vmatpush1.msra.mxu0 0.0
    %105 = vmatprep.subr.mxu0 0.0
    %106 = vmatpush1.msra.mxu0 0.0
    %107 = vmatprep.subr.mxu0 0.0
    %108 = vmatpush1.msra.mxu0 0.0
    %109 = vmatprep.subr.mxu0 0.0
    %110 = vmatpush1.msra.mxu0 0.0
    %111 = vmatprep.subr.mxu0 0.0
    %112 = vmatpush1.msra.mxu0 0.0
    %113 = vmatprep.subr.mxu0 0.0
    %114 = vmatpush1.msra.mxu0 0.0
    %115 = vmatprep.subr.mxu0 0.0
    %116 = vmatpush1.msra.mxu0 0.0
    %117 = vmatprep.subr.mxu0 0.0
    %118 = vmatpush1.msra.mxu0 0.0
    %119 = vmatprep.subr.mxu0 0.0
    %120 = vmatpush1.msra.mxu0 0.0
    %121 = vmatprep.subr.mxu0 0.0
    %122 = vmatpush1.msra.mxu0 0.0
    %123 = vmatprep.subr.mxu0 0.0
    %124 = vmatpush1.msra.mxu0 0.0
    %125 = vmatprep.subr.mxu0 0.0
    %126 = vmatpush1.msra.mxu0 0.0
    %127 = vmatprep.subr.mxu0 0.0
    %128 = vmatpush1.msra.mxu0 0.0
    %129 = vmatprep.subr.mxu0 0.0
    %130 = vmatpush1.msra.mxu0 0.0
    %131 = vmatprep.subr.mxu0 0.0
    %132 = vmatpush1.msra.mxu0 0.0
    %133 = vmatprep.subr.mxu0 0.0
    %134 = vmatpush1.msra.mxu0 0.0
    %135 = vmatprep.subr.mxu0 0.0
    %136 = vmatpush1.msra.mxu0 0.0
    %137 = vmatprep.subr.mxu0 0.0
    %138 = vmatpush1.msra.mxu0 0.0
    %139 = vmatprep.subr.mxu0 0.0
    %140 = vmatpush1.msra.mxu0 0.0
    %141 = vmatprep.subr.mxu0 0.0
    %142 = vmatpush1.msra.mxu0 0.0
    %143 = vmatprep.subr.mxu0 0.0
    %144 = vmatpush1.msra.mxu0 0.0
    %145 = vmatprep.subr.mxu0 0.0
    %146 = vmatpush1.msra.mxu0 0.0
    %147 = vmatprep.mubr.f32.mxu0 0.0
    %148 = vmatmul.mubr.f32.gmra.mrb[0].mxu0 %v81
    %v149 = vpop.f32.mrb[0].mxu0
    %v150 = vadd.f32 %v77, %v149
    %v151 = vpop.f32.mrb[0].mxu0
    %152 = vdwg.mxu0
    %v153 = vmax.f32 %v150, 0.0
    %v154 = vld [vmem:[#allocation4] sm:$0xff]
    %v155 = vld [vmem:[#allocation4 + $0x8] sm:$0xff]
    %v156 = vld [vmem:[#allocation4 + $0x10] sm:$0xff]
    %v157 = vld [vmem:[#allocation4 + $0x18] sm:$0xff]
    %v158 = vld [vmem:[#allocation4 + $0x20] sm:$0xff]
    %v159 = vld [vmem:[#allocation4 + $0x28] sm:$0xff]
    %v160 = vld [vmem:[#allocation4 + $0x30] sm:$0xff]
    %v161 = vld [vmem:[#allocation4 + $0x38] sm:$0xff]
    %v162 = vld [vmem:[#allocation4 + $0x40] sm:$0xff]
    %v163 = vld [vmem:[#allocation4 + $0x48] sm:$0xff]
    %v164 = vld [vmem:[#allocation4 + $0x50] sm:$0xff]
    %v165 = vld [vmem:[#allocation4 + $0x58] sm:$0xff]
    %v166 = vld [vmem:[#allocation4 + $0x60] sm:$0xff]
    %v167 = vld [vmem:[#allocation4 + $0x68] sm:$0xff]
    %v168 = vld [vmem:[#allocation4 + $0x70] sm:$0xff]
    %v169 = vld [vmem:[#allocation4 + $0x78] sm:$0xff]
    %v170 = vld [vmem:[%s4] sm:$0x1]
    %v172 = vlaneseq
    %v173 = vshrl.u32 %v172, 7
    %v174 = vsub.s32 0, %v173
    %v175 = vrot.slane %v170, %v174
    %177 = vmatprep.subr.mxu0 0.0
    %178 = vmatpush1.msra.mxu0 %v154
    %179 = vmatprep.subr.mxu0 0.0
    %180 = vmatpush1.msra.mxu0 %v155
    %181 = vmatprep.subr.mxu0 0.0
    %182 = vmatpush1.msra.mxu0 %v156
    %183 = vmatprep.subr.mxu0 0.0
    %184 = vmatpush1.msra.mxu0 %v157
    %185 = vmatprep.subr.mxu0 0.0
    %186 = vmatpush1.msra.mxu0 %v158
    %187 = vmatprep.subr.mxu0 0.0
    %188 = vmatpush1.msra.mxu0 %v159
    %189 = vmatprep.subr.mxu0 0.0
    %190 = vmatpush1.msra.mxu0 %v160
    %191 = vmatprep.subr.mxu0 0.0
    %192 = vmatpush1.msra.mxu0 %v161
    %193 = vmatprep.subr.mxu0 0.0
    %194 = vmatpush1.msra.mxu0 %v162
    %195 = vmatprep.subr.mxu0 0.0
    %196 = vmatpush1.msra.mxu0 %v163
    %197 = vmatprep.subr.mxu0 0.0
    %198 = vmatpush1.msra.mxu0 %v164
    %199 = vmatprep.subr.mxu0 0.0
    %200 = vmatpush1.msra.mxu0 %v165
    %201 = vmatprep.subr.mxu0 0.0
    %202 = vmatpush1.msra.mxu0 %v166
    %203 = vmatprep.subr.mxu0 0.0
    %204 = vmatpush1.msra.mxu0 %v167
    %205 = vmatprep.subr.mxu0 0.0
    %206 = vmatpush1.msra.mxu0 %v168
    %207 = vmatprep.subr.mxu0 0.0
    %208 = vmatpush1.msra.mxu0 %v169
    %209 = vmatprep.subr.mxu0 0.0
    %210 = vmatpush1.msra.mxu0 0.0
    %211 = vmatprep.subr.mxu0 0.0
    %212 = vmatpush1.msra.mxu0 0.0
    %213 = vmatprep.subr.mxu0 0.0
    %214 = vmatpush1.msra.mxu0 0.0
    %215 = vmatprep.subr.mxu0 0.0
    %216 = vmatpush1.msra.mxu0 0.0
    %217 = vmatprep.subr.mxu0 0.0
    %218 = vmatpush1.msra.mxu0 0.0
    %219 = vmatprep.subr.mxu0 0.0
    %220 = vmatpush1.msra.mxu0 0.0
    %221 = vmatprep.subr.mxu0 0.0
    %222 = vmatpush1.msra.mxu0 0.0
    %223 = vmatprep.subr.mxu0 0.0
    %224 = vmatpush1.msra.mxu0 0.0
    %225 = vmatprep.subr.mxu0 0.0
    %226 = vmatpush1.msra.mxu0 0.0
    %227 = vmatprep.subr.mxu0 0.0
    %228 = vmatpush1.msra.mxu0 0.0
    %229 = vmatprep.subr.mxu0 0.0
    %230 = vmatpush1.msra.mxu0 0.0
    %231 = vmatprep.subr.mxu0 0.0
    %232 = vmatpush1.msra.mxu0 0.0
    %233 = vmatprep.subr.mxu0 0.0
    %234 = vmatpush1.msra.mxu0 0.0
    %235 = vmatprep.subr.mxu0 0.0
    %236 = vmatpush1.msra.mxu0 0.0
    %237 = vmatprep.subr.mxu0 0.0
    %238 = vmatpush1.msra.mxu0 0.0
    %239 = vmatprep.subr.mxu0 0.0
    %240 = vmatpush1.msra.mxu0 0.0
    %241 = vmatprep.mubr.f32.mxu0 0.0
    %242 = vmatmul.mubr.f32.gmra.mrb[0].mxu0 %v153
    %v243 = vpop.f32.mrb[0].mxu0
    %v244 = vadd.f32 %v175, %v243
    %v245 = vpop.f32.mrb[0].mxu0
    %246 = vdwg.mxu0
    %v247 = vmax.f32 %v244, 0.0
    %v248 = vld [vmem:[#allocation6] sm:$0xff]
    %v249 = vld [vmem:[#allocation6 + $0x8] sm:$0xff]
    %v250 = vld [vmem:[#allocation6 + $0x10] sm:$0xff]
    %v251 = vld [vmem:[#allocation6 + $0x18] sm:$0xff]
    %v252 = vld [vmem:[#allocation6 + $0x20] sm:$0xff]
    %v253 = vld [vmem:[#allocation6 + $0x28] sm:$0xff]
    %v254 = vld [vmem:[#allocation6 + $0x30] sm:$0xff]
    %v255 = vld [vmem:[#allocation6 + $0x38] sm:$0xff]
    %v256 = vld [vmem:[#allocation6 + $0x40] sm:$0xff]
    %v257 = vld [vmem:[#allocation6 + $0x48] sm:$0xff]
    %v258 = vld [vmem:[#allocation6 + $0x50] sm:$0xff]
    %v259 = vld [vmem:[#allocation6 + $0x58] sm:$0xff]
    %v260 = vld [vmem:[#allocation6 + $0x60] sm:$0xff]
    %v261 = vld [vmem:[#allocation6 + $0x68] sm:$0xff]
    %v262 = vld [vmem:[#allocation6 + $0x70] sm:$0xff]
    %v263 = vld [vmem:[#allocation6 + $0x78] sm:$0xff]
    %v264 = vld [vmem:[%s6] sm:$0x1]
    %v266 = vlaneseq
    %v267 = vshrl.u32 %v266, 7
    %v268 = vsub.s32 0, %v267
    %v269 = vrot.slane %v264, %v268
    %271 = vmatprep.subr.mxu0 0.0
    %272 = vmatpush1.msra.mxu0 %v248
    %273 = vmatprep.subr.mxu0 0.0
    %274 = vmatpush1.msra.mxu0 %v249
    %275 = vmatprep.subr.mxu0 0.0
    %276 = vmatpush1.msra.mxu0 %v250
    %277 = vmatprep.subr.mxu0 0.0
    %278 = vmatpush1.msra.mxu0 %v251
    %279 = vmatprep.subr.mxu0 0.0
    %280 = vmatpush1.msra.mxu0 %v252
    %281 = vmatprep.subr.mxu0 0.0
    %282 = vmatpush1.msra.mxu0 %v253
    %283 = vmatprep.subr.mxu0 0.0
    %284 = vmatpush1.msra.mxu0 %v254
    %285 = vmatprep.subr.mxu0 0.0
    %286 = vmatpush1.msra.mxu0 %v255
    %287 = vmatprep.subr.mxu0 0.0
    %288 = vmatpush1.msra.mxu0 %v256
    %289 = vmatprep.subr.mxu0 0.0
    %290 = vmatpush1.msra.mxu0 %v257
    %291 = vmatprep.subr.mxu0 0.0
    %292 = vmatpush1.msra.mxu0 %v258
    %293 = vmatprep.subr.mxu0 0.0
    %294 = vmatpush1.msra.mxu0 %v259
    %295 = vmatprep.subr.mxu0 0.0
    %296 = vmatpush1.msra.mxu0 %v260
    %297 = vmatprep.subr.mxu0 0.0
    %298 = vmatpush1.msra.mxu0 %v261
    %299 = vmatprep.subr.mxu0 0.0
    %300 = vmatpush1.msra.mxu0 %v262
    %301 = vmatprep.subr.mxu0 0.0
    %302 = vmatpush1.msra.mxu0 %v263
    %303 = vmatprep.subr.mxu0 0.0
    %304 = vmatpush1.msra.mxu0 0.0
    %305 = vmatprep.subr.mxu0 0.0
    %306 = vmatpush1.msra.mxu0 0.0
    %307 = vmatprep.subr.mxu0 0.0
    %308 = vmatpush1.msra.mxu0 0.0
    %309 = vmatprep.subr.mxu0 0.0
    %310 = vmatpush1.msra.mxu0 0.0
    %311 = vmatprep.subr.mxu0 0.0
    %312 = vmatpush1.msra.mxu0 0.0
    %313 = vmatprep.subr.mxu0 0.0
    %314 = vmatpush1.msra.mxu0 0.0
    %315 = vmatprep.subr.mxu0 0.0
    %316 = vmatpush1.msra.mxu0 0.0
    %317 = vmatprep.subr.mxu0 0.0
    %318 = vmatpush1.msra.mxu0 0.0
    %319 = vmatprep.subr.mxu0 0.0
    %320 = vmatpush1.msra.mxu0 0.0
    %321 = vmatprep.subr.mxu0 0.0
    %322 = vmatpush1.msra.mxu0 0.0
    %323 = vmatprep.subr.mxu0 0.0
    %324 = vmatpush1.msra.mxu0 0.0
    %325 = vmatprep.subr.mxu0 0.0
    %326 = vmatpush1.msra.mxu0 0.0
    %327 = vmatprep.subr.mxu0 0.0
    %328 = vmatpush1.msra.mxu0 0.0
    %329 = vmatprep.subr.mxu0 0.0
    %330 = vmatpush1.msra.mxu0 0.0
    %331 = vmatprep.subr.mxu0 0.0
    %332 = vmatpush1.msra.mxu0 0.0
    %333 = vmatprep.subr.mxu0 0.0
    %334 = vmatpush1.msra.mxu0 0.0
    %335 = vmatprep.mubr.f32.mxu0 0.0
    %336 = vmatmul.mubr.f32.gmra.mrb[0].mxu0 %v247
    %v337 = vpop.f32.mrb[0].mxu0
    %v338 = vadd.f32 %v269, %v337
    %v339 = vpop.f32.mrb[0].mxu0
    %340 = vdwg.mxu0
    %341 = vst [vmem:[%s7] sm:$0xff] %v338
    // Predicated region
    $region42: #{model_critic_linear_forward.1} parent=1 // pred_check
      _
    $region43: #{model_critic_linear_forward.1} parent=1 // pred_check_branch
      %343 = sbr.rel (0) target = $region45
    $region44: #{model_critic_linear_forward.1} parent=1 // pred_region
      _
    $region45: #{model_critic_linear_forward.1} parent=1 // pred_fallthru
      _
    // Predicated region
    $region46: #{model_critic_linear_forward.1} parent=1 // pred_check
      _
    $region47: #{model_critic_linear_forward.1} parent=1 // pred_check_branch
      %345 = sbr.rel (0) target = $region49
    $region48: #{model_critic_linear_forward.1} parent=1 // pred_region
      _
    $region49: #{model_critic_linear_forward.1} parent=1 // pred_fallthru
      _
    %346 = vsyncpa [#allocation3], 1
    %347 = vsyncpa [#allocation5], 1

</llo_original>
